<compile_context>
chip_gen: v7x
topology: tpu7x:2x2x1
jax: 0.10.0
libtpu: 0.0.40
codegen_flags: <defaults>
</compile_context>

<pallas_src>
import functools
from dataclasses import dataclass

import jax
import jax.numpy as jnp
from jax.experimental import pallas as pl
from jax.experimental.pallas import tpu as pltpu


@dataclass
class Args:
    num_mix: int = 2
    num_frames: int = 3
    log_freq: bool = False       # TODO(synk): warpgrid + F.grid_sample log-freq warp not implemented
    weighted_loss: bool = True
    binary_mask: bool = True
    frame_pool: str = "maxpool"
    sound_activation: str = "no"
    vision_activation: str = "no"
    output_activation: str = "sigmoid"


# -------------------- fused kernel: prep + net_sound + synthesizer + weighted BCE ----
#
# One grid step == one batch element b.  All refs are channel/lane-dense:
#   mm_ref    (1, 1, FT)   mixture magnitude (flattened F*T)
#   mags_ref  (1, N, FT)   per-source magnitudes
#   vfeat_ref (1, N, K)    pooled vision features (from the tiny XLA vision net)
#   w1/b1     (H, 1)       sound-net layer 1 (pointwise 1->H)
#   w2t/b2    (K, H)/(K,1) sound-net layer 2 (pointwise H->K), pre-transposed
#   sb_ref    SMEM (2,)    synthesizer (scale, bias)
# outputs:
#   weight_ref (1, 1, FT), gt_ref (1, N, FT), pred_ref (1, N, FT), loss_ref (1, 1, 1)

def _fused_kernel(weighted_loss, binary_mask,
                  sb_ref, mm_ref, mags_ref, vfeat_ref,
                  w1_ref, b1_ref, w2t_ref, b2_ref,
                  weight_ref, gt_ref, pred_ref, loss_ref):
    mm = mm_ref[0] + 1e-10                                   # (1, FT)
    mags = mags_ref[0]                                       # (N, FT)

    # weighted_loss: weight = clamp(log1p(mag_mix), 0.001, 10)
    if weighted_loss:
        w = jnp.clip(jnp.log1p(mm), 0.001, 10.0)
    else:
        w = jnp.ones_like(mm)
    weight_ref[0] = w

    # gt masks
    if binary_mask:
        # N == 2 branch of the reference: gt[n] = (mags[n] > 0.5 * mag_mix)
        # TODO(synk): N > 2 pairwise-argmax branch not implemented (args.num_mix == 2)
        gt = (mags > 0.5 * mm).astype(jnp.float32)           # (N, FT)
    else:
        gt = jnp.clip(mags / mm, 0.0, 5.0)
    gt_ref[0] = gt

    # net_sound on log(mag_mix): pointwise 1 -> H -> K MLP, lane-dense (channels, F*T)
    logmm = jnp.log(mm)                                      # (1, FT)
    h = jnp.maximum(w1_ref[...] * logmm + b1_ref[...], 0.0)  # (H, FT)  ReLU
    s = jnp.dot(w2t_ref[...], h,
                preferred_element_type=jnp.float32) + b2_ref[...]       # (K, FT)
    # sound_activation == 'no'

    # net_synthesizer: inner product over K for BOTH mixtures at once (one MXU matmul)
    v = vfeat_ref[0]                                         # (N, K)  vision_activation == 'no'
    lin = jnp.dot(v, s, preferred_element_type=jnp.float32)  # (N, FT)
    z = sb_ref[0] * lin + sb_ref[1]                          # logits
    pred_ref[0] = jax.nn.sigmoid(z)                          # output_activation == 'sigmoid'

    # weighted BCE from logits: softplus(z) - gt*z  (numerically stable)
    sp = jnp.maximum(z, 0.0) + jnp.log1p(jnp.exp(-jnp.abs(z)))
    loss_ref[...] = jnp.sum(w * (sp - gt * z)).reshape(1, 1, 1)


def fused_forward(scale_bias, mm_flat, mags_flat, vfeat, w1, b1, w2t, b2,
                  *, weighted_loss, binary_mask):
    B, _, FT = mm_flat.shape
    N = mags_flat.shape[1]
    K, H = w2t.shape
    kernel = functools.partial(_fused_kernel, weighted_loss, binary_mask)
    return pl.pallas_call(
        kernel,
        out_shape=(jax.ShapeDtypeStruct((B, 1, FT), jnp.float32),   # weight
                   jax.ShapeDtypeStruct((B, N, FT), jnp.float32),   # gt_masks
                   jax.ShapeDtypeStruct((B, N, FT), jnp.float32),   # pred_masks
                   jax.ShapeDtypeStruct((B, 1, 1), jnp.float32)),   # per-b loss partial
        grid=(B,),
        in_specs=[pl.BlockSpec(memory_space=pltpu.MemorySpace.SMEM),          # (scale, bias)
                  pl.BlockSpec((1, 1, FT), lambda b: (b, 0, 0)),
                  pl.BlockSpec((1, N, FT), lambda b: (b, 0, 0)),
                  pl.BlockSpec((1, N, K), lambda b: (b, 0, 0)),
                  pl.BlockSpec((H, 1), lambda b: (0, 0)),
                  pl.BlockSpec((H, 1), lambda b: (0, 0)),
                  pl.BlockSpec((K, H), lambda b: (0, 0)),
                  pl.BlockSpec((K, 1), lambda b: (0, 0))],
        out_specs=(pl.BlockSpec((1, 1, FT), lambda b: (b, 0, 0)),
                   pl.BlockSpec((1, N, FT), lambda b: (b, 0, 0)),
                   pl.BlockSpec((1, N, FT), lambda b: (b, 0, 0)),
                   pl.BlockSpec((1, 1, 1), lambda b: (b, 0, 0))),
        # B stays a genuinely parallel grid axis so v7x's two TensorCores both work.
        # TODO(synk): at realistic sizes (F=T=256) add an F-tiling grid axis and raise
        # vmem_limit_bytes (v5e's 16 MiB default scoped VMEM) — unnecessary at demo scale.
        compiler_params=pltpu.CompilerParams(dimension_semantics=("parallel",)),
    )(scale_bias, mm_flat, mags_flat, vfeat, w1, b1, w2t, b2)


# -------------------- NetWrapper.forward ---------------------------------------------

def netwrapper_forward(params, batch_data, args: Args):
    mag_mix = batch_data["mag_mix"]          # (B, 1, F, T)
    mags = batch_data["mags"]                # (N, B, 1, F, T)
    feats = batch_data["feats"]              # (N, FN, B, D)
    _ = batch_data["coords"]                 # TODO(synk): sparse coords unused (dense vision stand-in)

    B, _, Fq, T = mag_mix.shape
    N = mags.shape[0]
    FT = Fq * T

    # net_vision stand-in + adaptive_max_pool1d over frames: a few KB of work ->
    # plain XLA (a Pallas launch would cost more than the op itself).
    vis = jnp.einsum("nfbd,dk->nfbk", feats, params["wv"]) + params["bv"][None, None]
    vfeat = jnp.transpose(jnp.max(vis, axis=1), (1, 0, 2))   # (B, N, K), 'no' activation

    # lane-dense layout plumbing (reshape/transpose outside the kernel)
    mm_flat = mag_mix.reshape(B, 1, FT)
    mags_flat = jnp.transpose(mags[:, :, 0], (1, 0, 2, 3)).reshape(B, N, FT)

    weight_f, gt_f, pred_f, loss_b = fused_forward(
        params["scale_bias"], mm_flat, mags_flat, vfeat,
        params["w1"], params["b1"], params["w2t"], params["b2"],
        weighted_loss=args.weighted_loss, binary_mask=args.binary_mask)

    weight = weight_f.reshape(B, 1, Fq, T)
    gt_masks = jnp.transpose(gt_f, (1, 0, 2)).reshape(N, B, 1, Fq, T)
    pred_masks = jnp.transpose(pred_f, (1, 0, 2)).reshape(N, B, 1, Fq, T)

    # crit: mean of the weighted BCE over all mixtures / elements
    err = (jnp.sum(loss_b) / (N * B * Fq * T)).reshape(1)

    return err, {"pred_masks": pred_masks, "gt_masks": gt_masks,
                 "mag_mix": mag_mix + 1e-10, "mags": mags, "weight": weight}


if __name__ == "__main__":
    args = Args()
    B, Fq, T = 2, 16, 16            # F*T = 256 -> lane-dense last dim
    N, FN = args.num_mix, args.num_frames
    D, H, K = 8, 16, 32

    key = jax.random.PRNGKey(0)
    ks = jax.random.split(key, 8)

    params = {
        "w1": 0.5 * jax.random.normal(ks[0], (H, 1), jnp.float32),
        "b1": jnp.zeros((H, 1), jnp.float32),
        "w2t": jax.random.normal(ks[1], (K, H), jnp.float32) / jnp.sqrt(float(H)),
        "b2": jnp.zeros((K, 1), jnp.float32),
        "wv": jax.random.normal(ks[2], (D, K), jnp.float32) / jnp.sqrt(float(D)),
        "bv": jnp.zeros((1, K), jnp.float32),
        "scale_bias": jnp.array([0.1, 0.0], jnp.float32),
    }

    batch_data = {
        "mag_mix": jax.random.uniform(ks[3], (B, 1, Fq, T), jnp.float32, 0.0, 2.0),
        "mags": jax.random.uniform(ks[4], (N, B, 1, Fq, T), jnp.float32, 0.0, 2.0),
        "feats": jax.random.normal(ks[5], (N, FN, B, D), jnp.float32),
        "coords": jnp.zeros((N, FN, B, 3), jnp.int32),
    }

    err, outputs = netwrapper_forward(params, batch_data, args)
    err = jax.block_until_ready(err)
    jax.block_until_ready(outputs["pred_masks"])

    assert err.shape == (1,) and jnp.isfinite(err).all()
    assert outputs["pred_masks"].shape == (N, B, 1, Fq, T)
    assert outputs["gt_masks"].shape == (N, B, 1, Fq, T)
    assert outputs["weight"].shape == (B, 1, Fq, T)
    assert jnp.isfinite(outputs["pred_masks"]).all()
    print("KERNEL_OK")
</pallas_src>

<mosaic_0001>
module attributes {stable_mosaic.version = 11 : i64} {
  func.func @_fused_kernel(%arg0: i32, %arg1: memref<2xf32, #tpu.memory_space<smem>>, %arg2: memref<1x1x256xf32, #tpu.memory_space<vmem>>, %arg3: memref<1x2x256xf32, #tpu.memory_space<vmem>>, %arg4: memref<1x2x32xf32, #tpu.memory_space<vmem>>, %arg5: memref<16x1xf32, #tpu.memory_space<vmem>>, %arg6: memref<16x1xf32, #tpu.memory_space<vmem>>, %arg7: memref<32x16xf32, #tpu.memory_space<vmem>>, %arg8: memref<32x1xf32, #tpu.memory_space<vmem>>, %arg9: memref<1x1x256xf32, #tpu.memory_space<vmem>>, %arg10: memref<1x2x256xf32, #tpu.memory_space<vmem>>, %arg11: memref<1x2x256xf32, #tpu.memory_space<vmem>>, %arg12: memref<1x1x1xf32, #tpu.memory_space<vmem>>) attributes {dimension_semantics = [#tpu.dimension_semantics<parallel>], iteration_bounds = array<i64: 2>, scalar_prefetch = 0 : i64, scratch_operands = 0 : i64, tpu.core_type = #tpu.core_type<tc>, window_params = [{transform_indices = @transform_0, window_bounds = array<i64: 2>}, {transform_indices = @transform_1, window_bounds = array<i64: 1, 1, 256>}, {transform_indices = @transform_2, window_bounds = array<i64: 1, 2, 256>}, {transform_indices = @transform_3, window_bounds = array<i64: 1, 2, 32>}, {pipeline_mode = #tpu.pipeline_mode<synchronous>, transform_indices = @transform_4, window_bounds = array<i64: 16, 1>}, {pipeline_mode = #tpu.pipeline_mode<synchronous>, transform_indices = @transform_5, window_bounds = array<i64: 16, 1>}, {pipeline_mode = #tpu.pipeline_mode<synchronous>, transform_indices = @transform_6, window_bounds = array<i64: 32, 16>}, {pipeline_mode = #tpu.pipeline_mode<synchronous>, transform_indices = @transform_7, window_bounds = array<i64: 32, 1>}, {transform_indices = @transform_8, window_bounds = array<i64: 1, 1, 256>}, {transform_indices = @transform_9, window_bounds = array<i64: 1, 2, 256>}, {transform_indices = @transform_10, window_bounds = array<i64: 1, 2, 256>}, {transform_indices = @transform_11, window_bounds = array<i64: 1, 1, 1>}]} {
    %c0 = arith.constant 0 : index
    %c0_0 = arith.constant 0 : index
    %c0_1 = arith.constant 0 : index
    %0 = vector.load %arg2[%c0, %c0_0, %c0_1] : memref<1x1x256xf32, #tpu.memory_space<vmem>>, vector<1x1x256xf32>
    %1 = vector.shape_cast %0 : vector<1x1x256xf32> to vector<1x256xf32>
    %cst = arith.constant 1.000000e-10 : f32
    %2 = vector.broadcast %cst : f32 to vector<1x256xf32>
    %3 = arith.addf %1, %2 : vector<1x256xf32>
    %c0_2 = arith.constant 0 : index
    %c0_3 = arith.constant 0 : index
    %c0_4 = arith.constant 0 : index
    %4 = vector.load %arg3[%c0_2, %c0_3, %c0_4] : memref<1x2x256xf32, #tpu.memory_space<vmem>>, vector<1x2x256xf32>
    %5 = vector.shape_cast %4 : vector<1x2x256xf32> to vector<2x256xf32>
    %6 = math.log1p %3 : vector<1x256xf32>
    %cst_5 = arith.constant 1.000000e-03 : f32
    %cst_6 = arith.constant 1.000000e+01 : f32
    %7 = vector.broadcast %cst_5 : f32 to vector<1x256xf32>
    %8 = arith.maximumf %7, %6 : vector<1x256xf32>
    %9 = vector.broadcast %cst_6 : f32 to vector<1x256xf32>
    %10 = arith.minimumf %9, %8 : vector<1x256xf32>
    %c0_7 = arith.constant 0 : index
    %c0_8 = arith.constant 0 : index
    %c0_9 = arith.constant 0 : index
    %11 = vector.load %arg9[%c0_7, %c0_8, %c0_9] : memref<1x1x256xf32, #tpu.memory_space<vmem>>, vector<1x1x256xf32>
    %12 = vector.shape_cast %11 : vector<1x1x256xf32> to vector<1x256xf32>
    %13 = vector.shape_cast %10 : vector<1x256xf32> to vector<1x1x256xf32>
    tpu.vector_store %arg9[%c0_7, %c0_8, %c0_9], %13 {strides = array<i32>} : memref<1x1x256xf32, #tpu.memory_space<vmem>>, vector<1x1x256xf32>,
    %cst_10 = arith.constant 5.000000e-01 : f32
    %14 = vector.broadcast %cst_10 : f32 to vector<1x256xf32>
    %15 = arith.mulf %14, %3 : vector<1x256xf32>
    %16 = vector.broadcast %15 : vector<1x256xf32> to vector<2x256xf32>
    %17 = arith.cmpf ogt, %5, %16 : vector<2x256xf32>
    %18 = arith.extui %17 : vector<2x256xi1> to vector<2x256xi32>
    %19 = arith.sitofp %18 : vector<2x256xi32> to vector<2x256xf32>
    %c0_11 = arith.constant 0 : index
    %c0_12 = arith.constant 0 : index
    %c0_13 = arith.constant 0 : index
    %20 = vector.load %arg10[%c0_11, %c0_12, %c0_13] : memref<1x2x256xf32, #tpu.memory_space<vmem>>, vector<1x2x256xf32>
    %21 = vector.shape_cast %20 : vector<1x2x256xf32> to vector<2x256xf32>
    %22 = vector.shape_cast %19 : vector<2x256xf32> to vector<1x2x256xf32>
    tpu.vector_store %arg10[%c0_11, %c0_12, %c0_13], %22 {strides = array<i32>} : memref<1x2x256xf32, #tpu.memory_space<vmem>>, vector<1x2x256xf32>,
    %23 = math.log %3 : vector<1x256xf32>
    %c0_14 = arith.constant 0 : index
    %c0_15 = arith.constant 0 : index
    %24 = vector.load %arg5[%c0_14, %c0_15] : memref<16x1xf32, #tpu.memory_space<vmem>>, vector<16x1xf32>
    %25 = vector.broadcast %24 : vector<16x1xf32> to vector<16x256xf32>
    %26 = vector.broadcast %23 : vector<1x256xf32> to vector<16x256xf32>
    %27 = arith.mulf %25, %26 : vector<16x256xf32>
    %c0_16 = arith.constant 0 : index
    %c0_17 = arith.constant 0 : index
    %28 = vector.load %arg6[%c0_16, %c0_17] : memref<16x1xf32, #tpu.memory_space<vmem>>, vector<16x1xf32>
    %29 = vector.broadcast %28 : vector<16x1xf32> to vector<16x256xf32>
    %30 = arith.addf %27, %29 : vector<16x256xf32>
    %cst_18 = arith.constant 0.000000e+00 : f32
    %31 = vector.broadcast %cst_18 : f32 to vector<16x256xf32>
    %32 = arith.maximumf %30, %31 : vector<16x256xf32>
    %c0_19 = arith.constant 0 : index
    %c0_20 = arith.constant 0 : index
    %33 = vector.load %arg7[%c0_19, %c0_20] : memref<32x16xf32, #tpu.memory_space<vmem>>, vector<32x16xf32>
    %cst_21 = arith.constant dense<0.000000e+00> : vector<32x256xf32>
    %34 = tpu.matmul %33, %32, %cst_21 {dimension_numbers = #tpu.dot_dimension_numbers<[1], [0], [0], [1], [0, 0, 1, 1], [], []>} : vector<32x16xf32>, vector<16x256xf32>, vector<32x256xf32> -> vector<32x256xf32>
    %c0_22 = arith.constant 0 : index
    %c0_23 = arith.constant 0 : index
    %35 = vector.load %arg8[%c0_22, %c0_23] : memref<32x1xf32, #tpu.memory_space<vmem>>, vector<32x1xf32>
    %36 = vector.broadcast %35 : vector<32x1xf32> to vector<32x256xf32>
    %37 = arith.addf %34, %36 : vector<32x256xf32>
    %c0_24 = arith.constant 0 : index
    %c0_25 = arith.constant 0 : index
    %c0_26 = arith.constant 0 : index
    %38 = vector.load %arg4[%c0_24, %c0_25, %c0_26] : memref<1x2x32xf32, #tpu.memory_space<vmem>>, vector<1x2x32xf32>
    %39 = vector.shape_cast %38 : vector<1x2x32xf32> to vector<2x32xf32>
    %cst_27 = arith.constant dense<0.000000e+00> : vector<2x256xf32>
    %40 = tpu.matmul %39, %37, %cst_27 {dimension_numbers = #tpu.dot_dimension_numbers<[1], [0], [0], [1], [0, 0, 1, 1], [], []>} : vector<2x32xf32>, vector<32x256xf32>, vector<2x256xf32> -> vector<2x256xf32>
    %c0_28 = arith.constant 0 : index
    %41 = memref.load %arg1[%c0_28] : memref<2xf32, #tpu.memory_space<smem>>
    %42 = vector.broadcast %41 : f32 to vector<2x256xf32>
    %43 = arith.mulf %42, %40 : vector<2x256xf32>
    %c1 = arith.constant 1 : index
    %44 = memref.load %arg1[%c1] : memref<2xf32, #tpu.memory_space<smem>>
    %45 = vector.broadcast %44 : f32 to vector<2x256xf32>
    %46 = arith.addf %43, %45 : vector<2x256xf32>
    %47 = arith.negf %46 : vector<2x256xf32>
    %48 = math.exp %47 : vector<2x256xf32>
    %cst_29 = arith.constant 1.000000e+00 : f32
    %49 = vector.broadcast %cst_29 : f32 to vector<2x256xf32>
    %50 = arith.addf %49, %48 : vector<2x256xf32>
    %51 = arith.divf %49, %50 : vector<2x256xf32>
    %c0_30 = arith.constant 0 : index
    %c0_31 = arith.constant 0 : index
    %c0_32 = arith.constant 0 : index
    %52 = vector.load %arg11[%c0_30, %c0_31, %c0_32] : memref<1x2x256xf32, #tpu.memory_space<vmem>>, vector<1x2x256xf32>
    %53 = vector.shape_cast %52 : vector<1x2x256xf32> to vector<2x256xf32>
    %54 = vector.shape_cast %51 : vector<2x256xf32> to vector<1x2x256xf32>
    tpu.vector_store %arg11[%c0_30, %c0_31, %c0_32], %54 {strides = array<i32>} : memref<1x2x256xf32, #tpu.memory_space<vmem>>, vector<1x2x256xf32>,
    %cst_33 = arith.constant 0.000000e+00 : f32
    %55 = vector.broadcast %cst_33 : f32 to vector<2x256xf32>
    %56 = arith.maximumf %46, %55 : vector<2x256xf32>
    %57 = math.absf %46 : vector<2x256xf32>
    %cst_34 = arith.constant 0.000000e+00 : f32
    %58 = vector.broadcast %cst_34 : f32 to vector<2x256xf32>
    %59 = arith.subf %58, %57 : vector<2x256xf32>
    %60 = math.exp %59 : vector<2x256xf32>
    %61 = math.log1p %60 : vector<2x256xf32>
    %62 = arith.addf %56, %61 : vector<2x256xf32>
    %63 = arith.mulf %19, %46 : vector<2x256xf32>
    %64 = arith.subf %62, %63 : vector<2x256xf32>
    %65 = vector.broadcast %10 : vector<1x256xf32> to vector<2x256xf32>
    %66 = arith.mulf %65, %64 : vector<2x256xf32>
    %67 = vector.shape_cast %66 : vector<2x256xf32> to vector<1x2x256xf32>
    %cst_35 = arith.constant dense<0.000000e+00> : vector<1xf32>
    %68 = vector.multi_reduction <add>, %67, %cst_35 [1, 2] : vector<1x2x256xf32> to vector<1xf32>
    %69 = vector.shape_cast %68 : vector<1xf32> to vector<1x1x1xf32>
    %70 = vector.extract %69[0, 0, 0] : f32 from vector<1x1x1xf32>
    %71 = vector.broadcast %70 : f32 to vector<1x1x1xf32>
    %c0_36 = arith.constant 0 : index
    %c0_37 = arith.constant 0 : index
    %c0_38 = arith.constant 0 : index
    %72 = vector.load %arg12[%c0_36, %c0_37, %c0_38] : memref<1x1x1xf32, #tpu.memory_space<vmem>>, vector<1x1x1xf32>
    tpu.vector_store %arg12[%c0_36, %c0_37, %c0_38], %71 {strides = array<i32>} : memref<1x1x1xf32, #tpu.memory_space<vmem>>, vector<1x1x1xf32>,
    return
  }
  func.func @transform_0(%arg0: i32) -> i32 {
    %c0_i32 = arith.constant 0 : i32
    %c0_i32_0 = arith.constant 0 : i32
    return %c0_i32 : i32
  }
  func.func @transform_1(%arg0: i32) -> (i32, i32, i32) {
    %c0_i32 = arith.constant 0 : i32
    %c0_i32_0 = arith.constant 0 : i32
    %c0_i32_1 = arith.constant 0 : i32
    return %arg0, %c0_i32, %c0_i32_0 : i32, i32, i32
  }
  func.func @transform_2(%arg0: i32) -> (i32, i32, i32) {
    %c0_i32 = arith.constant 0 : i32
    %c0_i32_0 = arith.constant 0 : i32
    %c0_i32_1 = arith.constant 0 : i32
    return %arg0, %c0_i32, %c0_i32_0 : i32, i32, i32
  }
  func.func @transform_3(%arg0: i32) -> (i32, i32, i32) {
    %c0_i32 = arith.constant 0 : i32
    %c0_i32_0 = arith.constant 0 : i32
    %c0_i32_1 = arith.constant 0 : i32
    return %arg0, %c0_i32, %c0_i32_0 : i32, i32, i32
  }
  func.func @transform_4(%arg0: i32) -> (i32, i32) {
    %c0_i32 = arith.constant 0 : i32
    %c0_i32_0 = arith.constant 0 : i32
    %c0_i32_1 = arith.constant 0 : i32
    return %c0_i32, %c0_i32_0 : i32, i32
  }
  func.func @transform_5(%arg0: i32) -> (i32, i32) {
    %c0_i32 = arith.constant 0 : i32
    %c0_i32_0 = arith.constant 0 : i32
    %c0_i32_1 = arith.constant 0 : i32
    return %c0_i32, %c0_i32_0 : i32, i32
  }
  func.func @transform_6(%arg0: i32) -> (i32, i32) {
    %c0_i32 = arith.constant 0 : i32
    %c0_i32_0 = arith.constant 0 : i32
    %c0_i32_1 = arith.constant 0 : i32
    return %c0_i32, %c0_i32_0 : i32, i32
  }
  func.func @transform_7(%arg0: i32) -> (i32, i32) {
    %c0_i32 = arith.constant 0 : i32
    %c0_i32_0 = arith.constant 0 : i32
    %c0_i32_1 = arith.constant 0 : i32
    return %c0_i32, %c0_i32_0 : i32, i32
  }
  func.func @transform_8(%arg0: i32) -> (i32, i32, i32) {
    %c0_i32 = arith.constant 0 : i32
    %c0_i32_0 = arith.constant 0 : i32
    %c0_i32_1 = arith.constant 0 : i32
    return %arg0, %c0_i32, %c0_i32_0 : i32, i32, i32
  }
  func.func @transform_9(%arg0: i32) -> (i32, i32, i32) {
    %c0_i32 = arith.constant 0 : i32
    %c0_i32_0 = arith.constant 0 : i32
    %c0_i32_1 = arith.constant 0 : i32
    return %arg0, %c0_i32, %c0_i32_0 : i32, i32, i32
  }
  func.func @transform_10(%arg0: i32) -> (i32, i32, i32) {
    %c0_i32 = arith.constant 0 : i32
    %c0_i32_0 = arith.constant 0 : i32
    %c0_i32_1 = arith.constant 0 : i32
    return %arg0, %c0_i32, %c0_i32_0 : i32, i32, i32
  }
  func.func @transform_11(%arg0: i32) -> (i32, i32, i32) {
    %c0_i32 = arith.constant 0 : i32
    %c0_i32_0 = arith.constant 0 : i32
    %c0_i32_1 = arith.constant 0 : i32
    return %arg0, %c0_i32, %c0_i32_0 : i32, i32, i32
  }
}

</mosaic_0001>

<llo_original>
// kernel: tpu_custom_call.1
$region0: #{tpu_custom_call.1}
  #allocation0 [shape = 'u32[]', space=smem, size = 0x4, offset = 0x4, fixed_abs, tag = 'smem constant byte address 0x4 - core index']
  #allocation1 [shape = 'u32[144,128]{1,0:T(1,128)}', space=vmem, size = 0x12000, scoped, tag = 'internal scratch']
  %s0 = inlined_call_operand.vmem [shape: f32[2], index: 0, kind: input, shape index: {}]
  %s1 = inlined_call_operand.vmem [shape: f32[2,1,256], index: 1, kind: input, shape index: {}]
  %s2 = inlined_call_operand.vmem [shape: f32[2,2,256], index: 2, kind: input, shape index: {}]
  %s3 = inlined_call_operand.vmem [shape: f32[2,2,32], index: 3, kind: input, shape index: {}]
  %s4 = inlined_call_operand.vmem [shape: f32[16,1], index: 4, kind: input, shape index: {}]
  %s5 = inlined_call_operand.vmem [shape: f32[16,1], index: 5, kind: input, shape index: {}]
  %s6 = inlined_call_operand.vmem [shape: f32[32,16], index: 6, kind: input, shape index: {}]
  %s7 = inlined_call_operand.vmem [shape: f32[32,1], index: 7, kind: input, shape index: {}]
  %s8 = inlined_call_operand.hbm [shape: f32[2,1,256], index: 8, kind: output, shape index: {0}]
  %s9 = inlined_call_operand.hbm [shape: f32[2,2,256], index: 9, kind: output, shape index: {1}]
  %s10 = inlined_call_operand.hbm [shape: f32[2,2,256], index: 10, kind: output, shape index: {2}]
  %s11 = inlined_call_operand.vmem [shape: f32[2,1,1], index: 11, kind: output, shape index: {3}]
  %12 = xla_tuple %s8, %s9, %s10, %s11
  %s13 = sld [smem:[#allocation0]]
  $region93: #{tpu_custom_call.1} parent=0
    _
  %s15 = ssub.s32 1, %s13
  %s16 = scalar_select 0, %s15, %s13
  $region1: #{tpu_custom_call.1} parent=0
    #allocation2 [shape = 'u8[512]{0}', space=smem, size = 0x200, scoped, tag = 'input window, operand 0, single buffered']
    #allocation3 [shape = 's32[2]{0}', space=sflag, size = 0x8, scoped, tag = 'scoped memory for tpu_custom_call.1']
    #allocation4 [shape = 's32[2]{0}', space=sflag, size = 0x8, scoped, tag = 'scoped memory for tpu_custom_call.1']
    #allocation5 [shape = 'u8[2048]{0}', space=vmem, size = 0x800, scoped, tag = 'output window, operand 0']
    #allocation6 [shape = 'u8[4096]{0}', space=vmem, size = 0x1000, scoped, tag = 'output window, operand 1']
    #allocation7 [shape = 's32[2]{0}', space=sflag, size = 0x8, scoped, tag = 'scoped memory for tpu_custom_call.1']
    #allocation8 [shape = 'u8[4096]{0}', space=vmem, size = 0x1000, scoped, tag = 'output window, operand 2']
    %17 = vsyncpa [#allocation4], 0
    %18 = vsyncpa [#allocation3], 0
    %s19 = scalar_lea.sflag [#allocation3], 1
    %20 = vsyncpa %s19, 0
    %21 = vsyncpa [#allocation7], 0
    %s22 = scalar_lea.sflag [#allocation7], 1
    %23 = vsyncpa %s22, 0
    loop: start=0, step=1, limit=4
    $region2: #{tpu_custom_call.1} parent=1 // loop_pre_header
      _
    $region3: #{tpu_custom_call.1} parent=1 // loop_header
      %s25 = sphi 0, %s29
      %p26 = scmp.ge.s32.totalorder %s25, 4
      %s33 = sphi 0, %s33
      %s35 = sphi 0, %s33
      %s36 = sphi 0, %s35
      %s50 = sphi 0, %s36
      %s56 = sphi 0, %s58
      %s59 = sphi 0, %s56
      %s60 = sphi 0, %s59
      %s76 = sphi 0, %s60
      %s82 = sphi 0, %s84
      %s85 = sphi 0, %s82
      %s86 = sphi 0, %s85
      %s102 = sphi 0, %s86
      %s108 = sphi 0, %s110
      %s111 = sphi 0, %s108
      %s112 = sphi 0, %s111
      %s128 = sphi 0, %s112
      %s132 = sphi 0, %s132
      %s134 = sphi 0, %s132
      %s135 = sphi 0, %s134
      %s149 = sphi 0, %s135
      %s153 = sphi 0, %s153
      %s155 = sphi 0, %s153
      %s156 = sphi 0, %s155
      %s170 = sphi 0, %s156
      %s174 = sphi 0, %s174
      %s176 = sphi 0, %s174
      %s177 = sphi 0, %s176
      %s191 = sphi 0, %s177
      %s195 = sphi 0, %s195
      %s197 = sphi 0, %s195
      %s198 = sphi 0, %s197
      %s212 = sphi 0, %s198
      %s218 = sphi 0, %s220
      %s221 = sphi 0, %s218
      %s222 = sphi 0, %s221
      %s238 = sphi 0, %s222
      %s244 = sphi 0, %s246
      %s247 = sphi 0, %s244
      %s248 = sphi 0, %s247
      %s264 = sphi 0, %s248
      %s270 = sphi 0, %s272
      %s273 = sphi 0, %s270
      %s274 = sphi 0, %s273
      %s290 = sphi 0, %s274
      %s296 = sphi 0, %s298
      %s299 = sphi 0, %s296
      %s300 = sphi 0, %s299
      %s316 = sphi 0, %s300
    $region4: #{tpu_custom_call.1} parent=1 // loop_header_branch
      %28 = sbr.rel (%p26) target = $region8
    $region5: #{tpu_custom_call.1} parent=1 // loop_body
      %s30 = ssub.s32 %s25, 1
      %s31 = ssub.s32 %s25, 2
      %s32 = sadd.s32 %s25, 1
      %s34 = sadd.s32 %s33, 1
      %p37 = scmp.eq.s32.totalorder %s25, 1
      %p38 = scmp.ne.s32.totalorder %s33, %s35
      %p39 = scmp.eq.s32.totalorder %s25, 0
      %p40 = por %p38, %p39
      %p41 = scmp.ne.s32.totalorder %s33, %s35
      %p42 = scmp.eq.s32.totalorder %s30, 1
      %p43 = por %p41, %p42
      %p44 = scmp.ne.s32.totalorder %s35, %s36
      %p45 = scmp.eq.s32.totalorder %s30, 0
      %p46 = por %p44, %p45
      %p47 = scmp.ne.s32.totalorder %s35, %s36
      %p48 = scmp.eq.s32.totalorder %s31, 1
      %p49 = por %p47, %p48
      %p51 = scmp.ne.s32.totalorder %s36, %s50
      %p52 = scmp.eq.s32.totalorder %s31, 0
      %p53 = por %p51, %p52
      %s54 = ssub.s32 %s25, %s32
      %p55 = scmp.eq.s32.totalorder %s54, 0
      %s57 = sadd.s32 %s56, 1
      %s58 = scalar_select %p55, %s56, %s57
      %p61 = pneg %p55
      %p62 = scmp.eq.s32.totalorder %s25, 1
      %p63 = por %p61, %p62
      %p64 = scmp.ne.s32.totalorder %s56, %s59
      %p65 = scmp.eq.s32.totalorder %s25, 0
      %p66 = por %p64, %p65
      %p67 = scmp.ne.s32.totalorder %s56, %s59
      %p68 = scmp.eq.s32.totalorder %s30, 1
      %p69 = por %p67, %p68
      %p70 = scmp.ne.s32.totalorder %s59, %s60
      %p71 = scmp.eq.s32.totalorder %s30, 0
      %p72 = por %p70, %p71
      %p73 = scmp.ne.s32.totalorder %s59, %s60
      %p74 = scmp.eq.s32.totalorder %s31, 1
      %p75 = por %p73, %p74
      %p77 = scmp.ne.s32.totalorder %s60, %s76
      %p78 = scmp.eq.s32.totalorder %s31, 0
      %p79 = por %p77, %p78
      %s80 = ssub.s32 %s25, %s32
      %p81 = scmp.eq.s32.totalorder %s80, 0
      %s83 = sadd.s32 %s82, 1
      %s84 = scalar_select %p81, %s82, %s83
      %p87 = pneg %p81
      %p88 = scmp.eq.s32.totalorder %s25, 1
      %p89 = por %p87, %p88
      %p90 = scmp.ne.s32.totalorder %s82, %s85
      %p91 = scmp.eq.s32.totalorder %s25, 0
      %p92 = por %p90, %p91
      %p93 = scmp.ne.s32.totalorder %s82, %s85
      %p94 = scmp.eq.s32.totalorder %s30, 1
      %p95 = por %p93, %p94
      %p96 = scmp.ne.s32.totalorder %s85, %s86
      %p97 = scmp.eq.s32.totalorder %s30, 0
      %p98 = por %p96, %p97
      %p99 = scmp.ne.s32.totalorder %s85, %s86
      %p100 = scmp.eq.s32.totalorder %s31, 1
      %p101 = por %p99, %p100
      %p103 = scmp.ne.s32.totalorder %s86, %s102
      %p104 = scmp.eq.s32.totalorder %s31, 0
      %p105 = por %p103, %p104
      %s106 = ssub.s32 %s25, %s32
      %p107 = scmp.eq.s32.totalorder %s106, 0
      %s109 = sadd.s32 %s108, 1
      %s110 = scalar_select %p107, %s108, %s109
      %p113 = pneg %p107
      %p114 = scmp.eq.s32.totalorder %s25, 1
      %p115 = por %p113, %p114
      %p116 = scmp.ne.s32.totalorder %s108, %s111
      %p117 = scmp.eq.s32.totalorder %s25, 0
      %p118 = por %p116, %p117
      %p119 = scmp.ne.s32.totalorder %s108, %s111
      %p120 = scmp.eq.s32.totalorder %s30, 1
      %p121 = por %p119, %p120
      %p122 = scmp.ne.s32.totalorder %s111, %s112
      %p123 = scmp.eq.s32.totalorder %s30, 0
      %p124 = por %p122, %p123
      %p125 = scmp.ne.s32.totalorder %s111, %s112
      %p126 = scmp.eq.s32.totalorder %s31, 1
      %p127 = por %p125, %p126
      %p129 = scmp.ne.s32.totalorder %s112, %s128
      %p130 = scmp.eq.s32.totalorder %s31, 0
      %p131 = por %p129, %p130
      %s133 = sadd.s32 %s132, 1
      %p136 = scmp.eq.s32.totalorder %s25, 1
      %p137 = scmp.ne.s32.totalorder %s132, %s134
      %p138 = scmp.eq.s32.totalorder %s25, 0
      %p139 = por %p137, %p138
      %p140 = scmp.ne.s32.totalorder %s132, %s134
      %p141 = scmp.eq.s32.totalorder %s30, 1
      %p142 = por %p140, %p141
      %p143 = scmp.ne.s32.totalorder %s134, %s135
      %p144 = scmp.eq.s32.totalorder %s30, 0
      %p145 = por %p143, %p144
      %p146 = scmp.ne.s32.totalorder %s134, %s135
      %p147 = scmp.eq.s32.totalorder %s31, 1
      %p148 = por %p146, %p147
      %p150 = scmp.ne.s32.totalorder %s135, %s149
      %p151 = scmp.eq.s32.totalorder %s31, 0
      %p152 = por %p150, %p151
      %s154 = sadd.s32 %s153, 1
      %p157 = scmp.eq.s32.totalorder %s25, 1
      %p158 = scmp.ne.s32.totalorder %s153, %s155
      %p159 = scmp.eq.s32.totalorder %s25, 0
      %p160 = por %p158, %p159
      %p161 = scmp.ne.s32.totalorder %s153, %s155
      %p162 = scmp.eq.s32.totalorder %s30, 1
      %p163 = por %p161, %p162
      %p164 = scmp.ne.s32.totalorder %s155, %s156
      %p165 = scmp.eq.s32.totalorder %s30, 0
      %p166 = por %p164, %p165
      %p167 = scmp.ne.s32.totalorder %s155, %s156
      %p168 = scmp.eq.s32.totalorder %s31, 1
      %p169 = por %p167, %p168
      %p171 = scmp.ne.s32.totalorder %s156, %s170
      %p172 = scmp.eq.s32.totalorder %s31, 0
      %p173 = por %p171, %p172
      %s175 = sadd.s32 %s174, 1
      %p178 = scmp.eq.s32.totalorder %s25, 1
      %p179 = scmp.ne.s32.totalorder %s174, %s176
      %p180 = scmp.eq.s32.totalorder %s25, 0
      %p181 = por %p179, %p180
      %p182 = scmp.ne.s32.totalorder %s174, %s176
      %p183 = scmp.eq.s32.totalorder %s30, 1
      %p184 = por %p182, %p183
      %p185 = scmp.ne.s32.totalorder %s176, %s177
      %p186 = scmp.eq.s32.totalorder %s30, 0
      %p187 = por %p185, %p186
      %p188 = scmp.ne.s32.totalorder %s176, %s177
      %p189 = scmp.eq.s32.totalorder %s31, 1
      %p190 = por %p188, %p189
      %p192 = scmp.ne.s32.totalorder %s177, %s191
      %p193 = scmp.eq.s32.totalorder %s31, 0
      %p194 = por %p192, %p193
      %s196 = sadd.s32 %s195, 1
      %p199 = scmp.eq.s32.totalorder %s25, 1
      %p200 = scmp.ne.s32.totalorder %s195, %s197
      %p201 = scmp.eq.s32.totalorder %s25, 0
      %p202 = por %p200, %p201
      %p203 = scmp.ne.s32.totalorder %s195, %s197
      %p204 = scmp.eq.s32.totalorder %s30, 1
      %p205 = por %p203, %p204
      %p206 = scmp.ne.s32.totalorder %s197, %s198
      %p207 = scmp.eq.s32.totalorder %s30, 0
      %p208 = por %p206, %p207
      %p209 = scmp.ne.s32.totalorder %s197, %s198
      %p210 = scmp.eq.s32.totalorder %s31, 1
      %p211 = por %p209, %p210
      %p213 = scmp.ne.s32.totalorder %s198, %s212
      %p214 = scmp.eq.s32.totalorder %s31, 0
      %p215 = por %p213, %p214
      %s216 = ssub.s32 %s25, %s32
      %p217 = scmp.eq.s32.totalorder %s216, 0
      %s219 = sadd.s32 %s218, 1
      %s220 = scalar_select %p217, %s218, %s219
      %p223 = pneg %p217
      %p224 = scmp.eq.s32.totalorder %s25, 1
      %p225 = por %p223, %p224
      %p226 = scmp.ne.s32.totalorder %s218, %s221
      %p227 = scmp.eq.s32.totalorder %s25, 0
      %p228 = por %p226, %p227
      %p229 = scmp.ne.s32.totalorder %s218, %s221
      %p230 = scmp.eq.s32.totalorder %s30, 1
      %p231 = por %p229, %p230
      %p232 = scmp.ne.s32.totalorder %s221, %s222
      %p233 = scmp.eq.s32.totalorder %s30, 0
      %p234 = por %p232, %p233
      %p235 = scmp.ne.s32.totalorder %s221, %s222
      %p236 = scmp.eq.s32.totalorder %s31, 1
      %p237 = por %p235, %p236
      %p239 = scmp.ne.s32.totalorder %s222, %s238
      %p240 = scmp.eq.s32.totalorder %s31, 0
      %p241 = por %p239, %p240
      %s242 = ssub.s32 %s25, %s32
      %p243 = scmp.eq.s32.totalorder %s242, 0
      %s245 = sadd.s32 %s244, 1
      %s246 = scalar_select %p243, %s244, %s245
      %p249 = pneg %p243
      %p250 = scmp.eq.s32.totalorder %s25, 1
      %p251 = por %p249, %p250
      %p252 = scmp.ne.s32.totalorder %s244, %s247
      %p253 = scmp.eq.s32.totalorder %s25, 0
      %p254 = por %p252, %p253
      %p255 = scmp.ne.s32.totalorder %s244, %s247
      %p256 = scmp.eq.s32.totalorder %s30, 1
      %p257 = por %p255, %p256
      %p258 = scmp.ne.s32.totalorder %s247, %s248
      %p259 = scmp.eq.s32.totalorder %s30, 0
      %p260 = por %p258, %p259
      %p261 = scmp.ne.s32.totalorder %s247, %s248
      %p262 = scmp.eq.s32.totalorder %s31, 1
      %p263 = por %p261, %p262
      %p265 = scmp.ne.s32.totalorder %s248, %s264
      %p266 = scmp.eq.s32.totalorder %s31, 0
      %p267 = por %p265, %p266
      %s268 = ssub.s32 %s25, %s32
      %p269 = scmp.eq.s32.totalorder %s268, 0
      %s271 = sadd.s32 %s270, 1
      %s272 = scalar_select %p269, %s270, %s271
      %p275 = pneg %p269
      %p276 = scmp.eq.s32.totalorder %s25, 1
      %p277 = por %p275, %p276
      %p278 = scmp.ne.s32.totalorder %s270, %s273
      %p279 = scmp.eq.s32.totalorder %s25, 0
      %p280 = por %p278, %p279
      %p281 = scmp.ne.s32.totalorder %s270, %s273
      %p282 = scmp.eq.s32.totalorder %s30, 1
      %p283 = por %p281, %p282
      %p284 = scmp.ne.s32.totalorder %s273, %s274
      %p285 = scmp.eq.s32.totalorder %s30, 0
      %p286 = por %p284, %p285
      %p287 = scmp.ne.s32.totalorder %s273, %s274
      %p288 = scmp.eq.s32.totalorder %s31, 1
      %p289 = por %p287, %p288
      %p291 = scmp.ne.s32.totalorder %s274, %s290
      %p292 = scmp.eq.s32.totalorder %s31, 0
      %p293 = por %p291, %p292
      %s294 = ssub.s32 %s25, %s32
      %p295 = scmp.eq.s32.totalorder %s294, 0
      %s297 = sadd.s32 %s296, 1
      %s298 = scalar_select %p295, %s296, %s297
      %p301 = pneg %p295
      %p302 = scmp.eq.s32.totalorder %s25, 1
      %p303 = por %p301, %p302
      %p304 = scmp.ne.s32.totalorder %s296, %s299
      %p305 = scmp.eq.s32.totalorder %s25, 0
      %p306 = por %p304, %p305
      %p307 = scmp.ne.s32.totalorder %s296, %s299
      %p308 = scmp.eq.s32.totalorder %s30, 1
      %p309 = por %p307, %p308
      %p310 = scmp.ne.s32.totalorder %s299, %s300
      %p311 = scmp.eq.s32.totalorder %s30, 0
      %p312 = por %p310, %p311
      %p313 = scmp.ne.s32.totalorder %s299, %s300
      %p314 = scmp.eq.s32.totalorder %s31, 1
      %p315 = por %p313, %p314
      %p317 = scmp.ne.s32.totalorder %s300, %s316
      %p318 = scmp.eq.s32.totalorder %s31, 0
      %p319 = por %p317, %p318
      %p320 = scmp.le.s32.totalorder 1, %s25
      %p321 = scmp.lt.s32.totalorder %s25, 3
      %p322 = pnand %p320, %p321
      %p323 = pneg %p322
      // Predicated region
      $region9: #{tpu_custom_call.1} parent=5 // pred_check
        _
      $region10: #{tpu_custom_call.1} parent=5 // pred_check_branch
        %325 = sbr.rel (%p322) target = $region12
      $region11: #{tpu_custom_call.1} parent=5 // pred_region
        %s326 = ssub.s32 %s25, 1
        // Predicated region
        $region13: #{tpu_custom_call.1} parent=11 // pred_check
          %p327 = pneg %p46
        $region14: #{tpu_custom_call.1} parent=11 // pred_check_branch
          %329 = sbr.rel (%p327) target = $region16
        $region15: #{tpu_custom_call.1} parent=11 // pred_region
          %s331 = ssub.s32 16, 16
          %332 = vsyncadd [#allocation4], %s331
          %s334 = sshll.u32 %s0, 4
          %s335 = int_to_ptr.vmem [resolvable:$true] %s334
          %337 = dma.vmem_to_smem %s335, 16, [#allocation2], [#allocation4]
        $region16: #{tpu_custom_call.1} parent=11 // pred_fallthru
          _
        // Predicated region
        $region17: #{tpu_custom_call.1} parent=11 // pred_check
          %p338 = pneg %p145
        $region18: #{tpu_custom_call.1} parent=11 // pred_check_branch
          %340 = sbr.rel (%p338) target = $region20
        $region19: #{tpu_custom_call.1} parent=11 // pred_region
          _
        $region20: #{tpu_custom_call.1} parent=11 // pred_fallthru
          _
        // Predicated region
        $region21: #{tpu_custom_call.1} parent=11 // pred_check
          %p341 = pneg %p166
        $region22: #{tpu_custom_call.1} parent=11 // pred_check_branch
          %343 = sbr.rel (%p341) target = $region24
        $region23: #{tpu_custom_call.1} parent=11 // pred_region
          _
        $region24: #{tpu_custom_call.1} parent=11 // pred_fallthru
          _
        // Predicated region
        $region25: #{tpu_custom_call.1} parent=11 // pred_check
          %p344 = pneg %p187
        $region26: #{tpu_custom_call.1} parent=11 // pred_check_branch
          %346 = sbr.rel (%p344) target = $region28
        $region27: #{tpu_custom_call.1} parent=11 // pred_region
          _
        $region28: #{tpu_custom_call.1} parent=11 // pred_fallthru
          _
        // Predicated region
        $region29: #{tpu_custom_call.1} parent=11 // pred_check
          %p347 = pneg %p208
        $region30: #{tpu_custom_call.1} parent=11 // pred_check_branch
          %349 = sbr.rel (%p347) target = $region32
        $region31: #{tpu_custom_call.1} parent=11 // pred_region
          _
        $region32: #{tpu_custom_call.1} parent=11 // pred_fallthru
          _
      $region12: #{tpu_custom_call.1} parent=5 // pred_fallthru
        _
      %p350 = scmp.lt.s32.totalorder %s25, 2
      // Predicated region
      $region33: #{tpu_custom_call.1} parent=5 // pred_check
        %p351 = pneg %p350
      $region34: #{tpu_custom_call.1} parent=5 // pred_check_branch
        %353 = sbr.rel (%p351) target = $region36
      $region35: #{tpu_custom_call.1} parent=5 // pred_region
        // Predicated region
        $region37: #{tpu_custom_call.1} parent=35 // pred_check
          %p354 = pneg %p66
        $region38: #{tpu_custom_call.1} parent=35 // pred_check_branch
          %356 = sbr.rel (%p354) target = $region40
        $region39: #{tpu_custom_call.1} parent=35 // pred_region
          %p357 = scmp.lt.s32.totalorder %s25, 1
          %s358 = scalar_select %p357, %s25, 1
          %s359 = smul.addr %s358, 2
          %s360 = scalar_lea.vmem %s1, %s359
        $region40: #{tpu_custom_call.1} parent=35 // pred_fallthru
          _
        // Predicated region
        $region41: #{tpu_custom_call.1} parent=35 // pred_check
          %p361 = pneg %p92
        $region42: #{tpu_custom_call.1} parent=35 // pred_check_branch
          %363 = sbr.rel (%p361) target = $region44
        $region43: #{tpu_custom_call.1} parent=35 // pred_region
          %p364 = scmp.lt.s32.totalorder %s25, 1
          %s365 = scalar_select %p364, %s25, 1
          %s366 = smul.addr %s365, 2
          %s367 = smul.addr %s366, 2
          %s368 = scalar_lea.vmem %s2, %s367
        $region44: #{tpu_custom_call.1} parent=35 // pred_fallthru
          _
        // Predicated region
        $region45: #{tpu_custom_call.1} parent=35 // pred_check
          %p369 = pneg %p118
        $region46: #{tpu_custom_call.1} parent=35 // pred_check_branch
          %371 = sbr.rel (%p369) target = $region48
        $region47: #{tpu_custom_call.1} parent=35 // pred_region
          %p372 = scmp.lt.s32.totalorder %s25, 1
          %s373 = scalar_select %p372, %s25, 1
          %s374 = smul.addr %s373, 2
          %s375 = scalar_lea.vmem %s3, %s374
        $region48: #{tpu_custom_call.1} parent=35 // pred_fallthru
          _
      $region36: #{tpu_custom_call.1} parent=5 // pred_fallthru
        _
      %p376 = scmp.le.s32.totalorder 1, %s25
      %p377 = scmp.lt.s32.totalorder %s25, 3
      %p378 = pnand %p376, %p377
      %p379 = pneg %p378
      // Predicated region
      $region49: #{tpu_custom_call.1} parent=5 // pred_check
        _
      $region50: #{tpu_custom_call.1} parent=5 // pred_check_branch
        %381 = sbr.rel (%p378) target = $region52
      $region51: #{tpu_custom_call.1} parent=5 // pred_region
        %s382 = ssub.s32 %s25, 1
        // Predicated region
        $region53: #{tpu_custom_call.1} parent=51 // pred_check
          %p383 = pneg %p46
        $region54: #{tpu_custom_call.1} parent=51 // pred_check_branch
          %385 = sbr.rel (%p383) target = $region56
        $region55: #{tpu_custom_call.1} parent=51 // pred_region
          %386 = dma.done [#allocation4], 16
        $region56: #{tpu_custom_call.1} parent=51 // pred_fallthru
          _
        %387 = sfence
        %p388 = pneg %p46
        %p389 = pneg %p43
        %p390 = scmp.lt.s32.totalorder %s30, 1
        %s391 = scalar_select %p390, %s30, 1
        %s392 = smul.addr %s391, 2
        %s393 = scalar_lea.vmem %s1, %s392
        %p394 = pneg %p72
        %p395 = pneg %p69
        %p396 = scmp.lt.s32.totalorder %s30, 1
        %s397 = scalar_select %p396, %s30, 1
        %s398 = smul.addr %s397, 2
        %s399 = smul.addr %s398, 2
        %s400 = scalar_lea.vmem %s2, %s399
        %p401 = pneg %p98
        %p402 = pneg %p95
        %p403 = scmp.lt.s32.totalorder %s30, 1
        %s404 = scalar_select %p403, %s30, 1
        %s405 = smul.addr %s404, 2
        %s406 = scalar_lea.vmem %s3, %s405
        %p407 = pneg %p124
        %p408 = pneg %p121
        %p409 = pneg %p145
        %p410 = pneg %p142
        %p411 = pneg %p166
        %p412 = pneg %p163
        %p413 = pneg %p187
        %p414 = pneg %p184
        %p415 = pneg %p208
        %p416 = pneg %p205
        %p417 = pneg %p234
        %p418 = pneg %p231
        %s419 = sand.u32 %s221, 1
        %s420 = scalar_lea.sflag [#allocation3], %s419
        %s421 = sand.u32 %s221, 1
        %s422 = smul.addr %s421, 2
        %s423 = scalar_lea.vmem [#allocation5], %s422
        %p424 = pneg %p260
        %p425 = pneg %p257
        %s426 = sand.u32 %s30, 1
        %s427 = scalar_lea.sflag [#allocation7], %s426
        %s428 = sand.u32 %s247, 1
        %s429 = smul.addr %s428, 4
        %s430 = scalar_lea.vmem [#allocation6], %s429
        %p431 = pneg %p286
        %p432 = pneg %p283
        %s433 = sand.u32 %s30, 1
        %s434 = scalar_lea.sflag [#allocation7], %s433
        %s435 = sand.u32 %s273, 1
        %s436 = smul.addr %s435, 4
        %s437 = scalar_lea.vmem [#allocation8], %s436
        %p438 = pneg %p312
        %p439 = pneg %p309
        %p440 = scmp.lt.s32.totalorder %s30, 1
        %s441 = scalar_select %p440, %s30, 1
        %s442 = scalar_lea.vmem %s11, %s441
        %p443 = scmp.lt.s32.totalorder %s30, 1
        %s444 = scalar_select %p443, %s30, 1
        %s445 = smul.addr %s444, 2
        %s446 = scalar_lea.vmem %s1, %s445
        %p447 = scmp.lt.s32.totalorder %s30, 1
        %s448 = scalar_select %p447, %s30, 1
        %s449 = smul.addr %s448, 2
        %s450 = smul.addr %s449, 2
        %s451 = scalar_lea.vmem %s2, %s450
        %p452 = scmp.lt.s32.totalorder %s30, 1
        %s453 = scalar_select %p452, %s30, 1
        %s454 = smul.addr %s453, 2
        %s455 = scalar_lea.vmem %s3, %s454
        %p456 = scmp.lt.s32.totalorder %s30, 1
        %s457 = scalar_select %p456, %s30, 1
        %s458 = scalar_lea.vmem %s11, %s457
        %v459 = vld [vmem:[%s446] sm:$0x3]
        %v460 = vadd.f32 %v459, 1e-10
        %v461 = vld [vmem:[%s451] sm:$0xf]
        %v462 = vadd.f32 %v460, 1.0
        %v463 = vlog2.pop %v462
        %v464 = vmul.f32 %v463, 0.6931472
        %v465 = vmul.f32 -0.5, %v460
        %v466 = vadd.f32 %v465, 1.0
        %v467 = vmul.f32 %v466, %v460
        %v468 = vand.u32 2147483647, %v460
        %vm469 = vcmp.lt.f32.partialorder %v468, 0.0004427343
        %v470 = vsel %vm469, %v467, %v464
        %v471 = vmax.f32 %v470, 0.001
        %v472 = vmin.f32 %v471, 10.0
        %v473 = vlaneseq
        %vm474 = vcmp.ge.s32.totalorder %v473, 0
        %vm475 = vcmp.lt.s32.totalorder %v473, 256
        %vm476 = vmand %vm474, %vm475
        %477 = vst.msk [vmem:[%s423] sm:$0x3] %vm476, %v472
        %v478 = vmul.f32 %v460, 0.5
        %v480 = vlaneseq
        %v481 = vshrl.u32 %v480, 7
        %v482 = vsub.s32 0, %v481
        %v483 = vrot.slane %v478, %v482
        %v484 = vlaneseq
        %v485 = vshrl.u32 %v484, 7
        %v486 = vsub.s32 1, %v485
        %v487 = vrot.slane %v478, %v486
        %v488 = vcombine.low %v483, %v487
        %v490 = vunpack.c.l.s4 1983009808
        %v491 = vunpack.c.0.s8 %v490
        %v492 = vlaneseq
        %v493 = vshrl.u32 %v492, 7
        %v494 = vsub.s32 %v491, %v493
        %v495 = vrot.slane %v488, %v494
        %vm497 = vcmp.gt.f32.partialorder %v461, %v495
        %v498 = vsel %vm497, 1, 0
        %v499 = vcvt.s32.f32 %v498
        %500 = vst [vmem:[%s430] sm:$0xf] %v499
        %v501 = vlog2.pop %v460
        %v502 = vmul.f32 %v501, 0.6931472
        %v503 = vld [vmem:[%s4] sm:$0xff]
        %v504 = vld [vmem:[%s4 + $0x8] sm:$0xff]
        %506 = vset.pattern.permute.xlu0 0
        %507 = vperm.xlu0 %506, %v503
        %v508 = vpop.permute.xlu0 %507
        %511 = vset.pattern.permute.xlu0 0
        %512 = vperm.xlu0 %511, %v504
        %v513 = vpop.permute.xlu0 %512
        %v516 = vlaneseq
        %v517 = vshrl.u32 %v516, 7
        %v518 = vsub.s32 0, %v517
        %v519 = vrot.slane %v502, %v518
        %v520 = vlaneseq
        %v521 = vshrl.u32 %v520, 7
        %v522 = vsub.s32 1, %v521
        %v523 = vrot.slane %v502, %v522
        %v526 = vmul.f32 %v508, %v519
        %v527 = vmul.f32 %v508, %v523
        %v528 = vmul.f32 %v513, %v519
        %v529 = vmul.f32 %v513, %v523
        %v530 = vld [vmem:[%s5] sm:$0xff]
        %v531 = vld [vmem:[%s5 + $0x8] sm:$0xff]
        %533 = vset.pattern.permute.xlu0 0
        %534 = vperm.xlu0 %533, %v530
        %v535 = vpop.permute.xlu0 %534
        %538 = vset.pattern.permute.xlu0 0
        %539 = vperm.xlu0 %538, %v531
        %v540 = vpop.permute.xlu0 %539
        %v542 = vadd.f32 %v526, %v535
        %v543 = vadd.f32 %v527, %v535
        %v544 = vadd.f32 %v528, %v540
        %v545 = vadd.f32 %v529, %v540
        %v546 = vmax.f32 %v542, 0.0
        %v547 = vmax.f32 %v543, 0.0
        %v548 = vmax.f32 %v544, 0.0
        %v549 = vmax.f32 %v545, 0.0
        %v550 = vld [vmem:[%s6] sm:$0xff]
        %v551 = vld [vmem:[%s6 + $0x8] sm:$0xff]
        %v552 = vld [vmem:[%s6 + $0x10] sm:$0xff]
        %v553 = vld [vmem:[%s6 + $0x18] sm:$0xff]
        %v554 = vld [vmem:[%s7] sm:$0xff]
        %v555 = vld [vmem:[%s7 + $0x8] sm:$0xff]
        %v556 = vld [vmem:[%s7 + $0x10] sm:$0xff]
        %v557 = vld [vmem:[%s7 + $0x18] sm:$0xff]
        %559 = vset.pattern.permute.xlu0 0
        %560 = vperm.xlu0 %559, %v554
        %v561 = vpop.permute.xlu0 %560
        %564 = vset.pattern.permute.xlu0 0
        %565 = vperm.xlu0 %564, %v555
        %v566 = vpop.permute.xlu0 %565
        %569 = vset.pattern.permute.xlu0 0
        %570 = vperm.xlu0 %569, %v556
        %v571 = vpop.permute.xlu0 %570
        %574 = vset.pattern.permute.xlu0 0
        %575 = vperm.xlu0 %574, %v557
        %v576 = vpop.permute.xlu0 %575
        %vm578 = vcmask 130048
        %v580 = vsel %vm578, %v550, 0
        %v583 = vsel %vm578, %v551, 0
        %v586 = vsel %vm578, %v552, 0
        %v589 = vsel %vm578, %v553, 0
        %591 = vmatprep.subr.mxu0 %v547
        %592 = vmatpush1.msra.mxu0 %v546
        %593 = vmatprep.subr.mxu0 %v549
        %594 = vmatpush1.msra.mxu0 %v548
        %595 = vmatprep.subr.mxu0 0.0
        %596 = vmatpush1.msra.mxu0 0.0
        %597 = vmatprep.subr.mxu0 0.0
        %598 = vmatpush1.msra.mxu0 0.0
        %599 = vmatprep.subr.mxu0 0.0
        %600 = vmatpush1.msra.mxu0 0.0
        %601 = vmatprep.subr.mxu0 0.0
        %602 = vmatpush1.msra.mxu0 0.0
        %603 = vmatprep.subr.mxu0 0.0
        %604 = vmatpush1.msra.mxu0 0.0
        %605 = vmatprep.subr.mxu0 0.0
        %606 = vmatpush1.msra.mxu0 0.0
        %607 = vmatprep.subr.mxu0 0.0
        %608 = vmatpush1.msra.mxu0 0.0
        %609 = vmatprep.subr.mxu0 0.0
        %610 = vmatpush1.msra.mxu0 0.0
        %611 = vmatprep.subr.mxu0 0.0
        %612 = vmatpush1.msra.mxu0 0.0
        %613 = vmatprep.subr.mxu0 0.0
        %614 = vmatpush1.msra.mxu0 0.0
        %615 = vmatprep.subr.mxu0 0.0
        %616 = vmatpush1.msra.mxu0 0.0
        %617 = vmatprep.subr.mxu0 0.0
        %618 = vmatpush1.msra.mxu0 0.0
        %619 = vmatprep.subr.mxu0 0.0
        %620 = vmatpush1.msra.mxu0 0.0
        %621 = vmatprep.subr.mxu0 0.0
        %622 = vmatpush1.msra.mxu0 0.0
        %623 = vmatprep.subr.mxu0 0.0
        %624 = vmatpush1.msra.mxu0 0.0
        %625 = vmatprep.subr.mxu0 0.0
        %626 = vmatpush1.msra.mxu0 0.0
        %627 = vmatprep.subr.mxu0 0.0
        %628 = vmatpush1.msra.mxu0 0.0
        %629 = vmatprep.subr.mxu0 0.0
        %630 = vmatpush1.msra.mxu0 0.0
        %631 = vmatprep.subr.mxu0 0.0
        %632 = vmatpush1.msra.mxu0 0.0
        %633 = vmatprep.subr.mxu0 0.0
        %634 = vmatpush1.msra.mxu0 0.0
        %635 = vmatprep.subr.mxu0 0.0
        %636 = vmatpush1.msra.mxu0 0.0
        %637 = vmatprep.subr.mxu0 0.0
        %638 = vmatpush1.msra.mxu0 0.0
        %639 = vmatprep.subr.mxu0 0.0
        %640 = vmatpush1.msra.mxu0 0.0
        %641 = vmatprep.subr.mxu0 0.0
        %642 = vmatpush1.msra.mxu0 0.0
        %643 = vmatprep.subr.mxu0 0.0
        %644 = vmatpush1.msra.mxu0 0.0
        %645 = vmatprep.subr.mxu0 0.0
        %646 = vmatpush1.msra.mxu0 0.0
        %647 = vmatprep.subr.mxu0 0.0
        %648 = vmatpush1.msra.mxu0 0.0
        %649 = vmatprep.subr.mxu0 0.0
        %650 = vmatpush1.msra.mxu0 0.0
        %651 = vmatprep.subr.mxu0 0.0
        %652 = vmatpush1.msra.mxu0 0.0
        %653 = vmatprep.subr.mxu0 0.0
        %654 = vmatpush1.msra.mxu0 0.0
        %655 = vmatprep.mubr.f32.mxu0 0.0
        %656 = vmatmul.mubr.f32.gmra.mrb[0].mxu0 %v580
        %v657 = vpop.f32.mrb[0].mxu0
        %v658 = vadd.f32 %v561, %v657
        %v659 = vpop.f32.mrb[0].mxu0
        %v660 = vadd.f32 %v561, %v659
        %661 = vmatprep.mubr.f32.mxu0 0.0
        %662 = vmatmul.mubr.f32.gmra.mrb[0].mxu0 %v583
        %v663 = vpop.f32.mrb[0].mxu0
        %v664 = vadd.f32 %v566, %v663
        %v665 = vpop.f32.mrb[0].mxu0
        %v666 = vadd.f32 %v566, %v665
        %667 = vmatprep.mubr.f32.mxu0 0.0
        %668 = vmatmul.mubr.f32.gmra.mrb[0].mxu0 %v586
        %v669 = vpop.f32.mrb[0].mxu0
        %v670 = vadd.f32 %v571, %v669
        %v671 = vpop.f32.mrb[0].mxu0
        %v672 = vadd.f32 %v571, %v671
        %673 = vmatprep.mubr.f32.mxu0 0.0
        %674 = vmatmul.mubr.f32.gmra.mrb[0].mxu0 %v589
        %v675 = vpop.f32.mrb[0].mxu0
        %v676 = vadd.f32 %v576, %v675
        %v677 = vpop.f32.mrb[0].mxu0
        %v678 = vadd.f32 %v576, %v677
        %679 = vdwg.mxu0
        %v680 = vld [vmem:[%s455] sm:$0x3]
        %vm681 = vcmask 261120
        %v683 = vsel %vm681, %v680, 0
        %685 = vmatprep.subr.mxu0 %v660
        %686 = vmatpush1.msra.mxu0 %v658
        %687 = vmatprep.subr.mxu0 %v666
        %688 = vmatpush1.msra.mxu0 %v664
        %689 = vmatprep.subr.mxu0 %v672
        %690 = vmatpush1.msra.mxu0 %v670
        %691 = vmatprep.subr.mxu0 %v678
        %692 = vmatpush1.msra.mxu0 %v676
        %693 = vmatprep.subr.mxu0 0.0
        %694 = vmatpush1.msra.mxu0 0.0
        %695 = vmatprep.subr.mxu0 0.0
        %696 = vmatpush1.msra.mxu0 0.0
        %697 = vmatprep.subr.mxu0 0.0
        %698 = vmatpush1.msra.mxu0 0.0
        %699 = vmatprep.subr.mxu0 0.0
        %700 = vmatpush1.msra.mxu0 0.0
        %701 = vmatprep.subr.mxu0 0.0
        %702 = vmatpush1.msra.mxu0 0.0
        %703 = vmatprep.subr.mxu0 0.0
        %704 = vmatpush1.msra.mxu0 0.0
        %705 = vmatprep.subr.mxu0 0.0
        %706 = vmatpush1.msra.mxu0 0.0
        %707 = vmatprep.subr.mxu0 0.0
        %708 = vmatpush1.msra.mxu0 0.0
        %709 = vmatprep.subr.mxu0 0.0
        %710 = vmatpush1.msra.mxu0 0.0
        %711 = vmatprep.subr.mxu0 0.0
        %712 = vmatpush1.msra.mxu0 0.0
        %713 = vmatprep.subr.mxu0 0.0
        %714 = vmatpush1.msra.mxu0 0.0
        %715 = vmatprep.subr.mxu0 0.0
        %716 = vmatpush1.msra.mxu0 0.0
        %717 = vmatprep.subr.mxu0 0.0
        %718 = vmatpush1.msra.mxu0 0.0
        %719 = vmatprep.subr.mxu0 0.0
        %720 = vmatpush1.msra.mxu0 0.0
        %721 = vmatprep.subr.mxu0 0.0
        %722 = vmatpush1.msra.mxu0 0.0
        %723 = vmatprep.subr.mxu0 0.0
        %724 = vmatpush1.msra.mxu0 0.0
        %725 = vmatprep.subr.mxu0 0.0
        %726 = vmatpush1.msra.mxu0 0.0
        %727 = vmatprep.subr.mxu0 0.0
        %728 = vmatpush1.msra.mxu0 0.0
        %729 = vmatprep.subr.mxu0 0.0
        %730 = vmatpush1.msra.mxu0 0.0
        %731 = vmatprep.subr.mxu0 0.0
        %732 = vmatpush1.msra.mxu0 0.0
        %733 = vmatprep.subr.mxu0 0.0
        %734 = vmatpush1.msra.mxu0 0.0
        %735 = vmatprep.subr.mxu0 0.0
        %736 = vmatpush1.msra.mxu0 0.0
        %737 = vmatprep.subr.mxu0 0.0
        %738 = vmatpush1.msra.mxu0 0.0
        %739 = vmatprep.subr.mxu0 0.0
        %740 = vmatpush1.msra.mxu0 0.0
        %741 = vmatprep.subr.mxu0 0.0
        %742 = vmatpush1.msra.mxu0 0.0
        %743 = vmatprep.subr.mxu0 0.0
        %744 = vmatpush1.msra.mxu0 0.0
        %745 = vmatprep.subr.mxu0 0.0
        %746 = vmatpush1.msra.mxu0 0.0
        %747 = vmatprep.subr.mxu0 0.0
        %748 = vmatpush1.msra.mxu0 0.0
        %749 = vmatprep.mubr.f32.mxu0 0.0
        %750 = vmatmul.mubr.f32.gmra.mrb[0].mxu0 %v683
        %v751 = vpop.f32.mrb[0].mxu0
        %v752 = vadd.f32 0.0, %v751
        %v753 = vpop.f32.mrb[0].mxu0
        %v754 = vadd.f32 0.0, %v753
        %755 = vdwg.mxu0
        %s756 = sld [smem:[#allocation2]]
        %v757 = vstv %s756
        %v758 = vmul.f32 %v757, %v752
        %v759 = vmul.f32 %v757, %v754
        %s760 = sld [smem:[#allocation2 + $0x1]]
        %v761 = vstv %s760
        %v762 = vadd.f32 %v758, %v761
        %v763 = vadd.f32 %v759, %v761
        %v764 = vxor.u32 %v762, 2147483648
        %v765 = vxor.u32 %v763, 2147483648
        %v766 = vmul.f32 %v764, 1.442695
        %v767 = vpow.pop %v766
        %v768 = vmul.f32 %v765, 1.442695
        %v769 = vpow.pop %v768
        %v770 = vadd.f32 %v767, 1.0
        %v771 = vadd.f32 %v769, 1.0
        %v772 = vrcp.pop %v770
        %v773 = vmul.f32 1.0, %v772
        %v774 = vrcp.pop %v771
        %v775 = vmul.f32 1.0, %v774
        %v778 = vcombine.low %v773, %v775
        %v780 = vunpack.c.l.s4 1983009808
        %v781 = vunpack.c.0.s8 %v780
        %v782 = vlaneseq
        %v783 = vshrl.u32 %v782, 7
        %v784 = vsub.s32 %v781, %v783
        %v785 = vrot.slane %v778, %v784
        %787 = vst [vmem:[%s437] sm:$0xf] %v785
        %v788 = vmax.f32 %v762, 0.0
        %v789 = vmax.f32 %v763, 0.0
        %v790 = vand.u32 2147483647, %v762
        %v791 = vand.u32 2147483647, %v763
        %v792 = vsub.f32 0.0, %v790
        %v793 = vsub.f32 0.0, %v791
        %v794 = vmul.f32 %v792, 1.442695
        %v795 = vpow.pop %v794
        %v796 = vmul.f32 %v793, 1.442695
        %v797 = vpow.pop %v796
        %v798 = vadd.f32 %v795, 1.0
        %v799 = vlog2.pop %v798
        %v800 = vmul.f32 %v799, 0.6931472
        %v801 = vmul.f32 -0.5, %v795
        %v802 = vadd.f32 %v801, 1.0
        %v803 = vmul.f32 %v802, %v795
        %v804 = vand.u32 2147483647, %v795
        %vm805 = vcmp.lt.f32.partialorder %v804, 0.0004427343
        %v806 = vsel %vm805, %v803, %v800
        %v807 = vadd.f32 %v797, 1.0
        %v808 = vlog2.pop %v807
        %v809 = vmul.f32 %v808, 0.6931472
        %v810 = vmul.f32 -0.5, %v797
        %v811 = vadd.f32 %v810, 1.0
        %v812 = vmul.f32 %v811, %v797
        %v813 = vand.u32 2147483647, %v797
        %vm814 = vcmp.lt.f32.partialorder %v813, 0.0004427343
        %v815 = vsel %vm814, %v812, %v809
        %v816 = vadd.f32 %v788, %v806
        %v817 = vadd.f32 %v789, %v815
        %v820 = vcombine.low %v762, %v763
        %v822 = vunpack.c.l.s4 1983009808
        %v823 = vunpack.c.0.s8 %v822
        %v824 = vlaneseq
        %v825 = vshrl.u32 %v824, 7
        %v826 = vsub.s32 %v823, %v825
        %v827 = vrot.slane %v820, %v826
        %v829 = vmul.f32 %v499, %v827
        %v832 = vunpack.c.l.s4 1983009808
        %v833 = vunpack.c.0.s8 %v832
        %v834 = vlaneseq
        %v835 = vshrl.u32 %v834, 7
        %v836 = vsub.s32 %v833, %v835
        %v837 = vrot.slane %v829, %v836
        %v838 = vcombine.high %v837, %v837
        %v841 = vsub.f32 %v816, %v837
        %v842 = vsub.f32 %v817, %v838
        %v844 = vlaneseq
        %v845 = vshrl.u32 %v844, 7
        %v846 = vsub.s32 0, %v845
        %v847 = vrot.slane %v472, %v846
        %v848 = vlaneseq
        %v849 = vshrl.u32 %v848, 7
        %v850 = vsub.s32 1, %v849
        %v851 = vrot.slane %v472, %v850
        %v854 = vmul.f32 %v847, %v841
        %v855 = vmul.f32 %v851, %v842
        %vm856 = vcmask 1041408
        %v857 = vsel %vm856, %v854, 0.0
        %v858 = vsel %vm856, %v855, 0.0
        %v859 = vadd.f32 %v857, %v858
        %860 = vadd.xlane.f32.xlu0 %v859
        %v861 = vpop.xlane.xlu0 %860
        %v862 = vrot.slane %v861, 4
        %v863 = vadd.f32 %v861, %v862
        %v864 = vrot.slane %v863, 2
        %v865 = vadd.f32 %v863, %v864
        %v866 = vrot.slane %v865, 1
        %v867 = vadd.f32 %v865, %v866
        %s868 = vtos %v867
        %v869 = vstv %s868
        %vm870 = vcmask 0
        %871 = vst.msk [vmem:[%s458] sm:$0x1] %vm870, %v869
        %s872 = sand.u32 %s221, 1
        %s873 = scalar_lea.sflag [#allocation3], %s872
        %s874 = sand.u32 %s221, 1
        %s875 = smul.addr %s874, 2
        %s876 = scalar_lea.vmem [#allocation5], %s875
        %s877 = sand.u32 %s30, 1
        %s878 = scalar_lea.sflag [#allocation7], %s877
        %s879 = sand.u32 %s247, 1
        %s880 = smul.addr %s879, 4
        %s881 = scalar_lea.vmem [#allocation6], %s880
        %s882 = sand.u32 %s30, 1
        %s883 = scalar_lea.sflag [#allocation7], %s882
        %s884 = sand.u32 %s273, 1
        %s885 = smul.addr %s884, 4
        %s886 = scalar_lea.vmem [#allocation8], %s885
        %p887 = scmp.lt.s32.totalorder %s30, 1
        %s888 = scalar_select %p887, %s30, 1
        %s889 = scalar_lea.vmem %s11, %s888
        // Predicated region
        $region57: #{tpu_custom_call.1} parent=51 // pred_check
          %p890 = pneg %p231
        $region58: #{tpu_custom_call.1} parent=51 // pred_check_branch
          %892 = sbr.rel (%p890) target = $region60
        $region59: #{tpu_custom_call.1} parent=51 // pred_region
          %s894 = ssub.s32 32, 32
          %895 = vsyncadd %s873, %s894
          %s896 = smul.addr %s30, 2
          %s897 = smul.addr %s896, 16
          %s898 = scalar_lea.hbm %s8, %s897
          %s900 = sshll.u32 %s876, 4
          %s901 = int_to_ptr.vmem [resolvable:$true] %s900
          %903 = dma.vmem_to_hbm [thread:$0]  %s901, 32, %s898, %s873
        $region60: #{tpu_custom_call.1} parent=51 // pred_fallthru
          _
        // Predicated region
        $region61: #{tpu_custom_call.1} parent=51 // pred_check
          %p904 = pneg %p257
        $region62: #{tpu_custom_call.1} parent=51 // pred_check_branch
          %906 = sbr.rel (%p904) target = $region64
        $region63: #{tpu_custom_call.1} parent=51 // pred_region
          %s908 = ssub.s32 64, 64
          %909 = vsyncadd %s878, %s908
          %s910 = smul.addr %s30, 2
          %s911 = smul.addr %s910, 32
          %s912 = scalar_lea.hbm %s9, %s911
          %s914 = sshll.u32 %s881, 4
          %s915 = int_to_ptr.vmem [resolvable:$true] %s914
          %917 = dma.vmem_to_hbm [thread:$0]  %s915, 64, %s912, %s878
        $region64: #{tpu_custom_call.1} parent=51 // pred_fallthru
          _
        // Predicated region
        $region65: #{tpu_custom_call.1} parent=51 // pred_check
          %p918 = pneg %p283
        $region66: #{tpu_custom_call.1} parent=51 // pred_check_branch
          %920 = sbr.rel (%p918) target = $region68
        $region67: #{tpu_custom_call.1} parent=51 // pred_region
          %s922 = ssub.s32 64, 64
          %923 = vsyncadd %s883, %s922
          %s924 = smul.addr %s30, 2
          %s925 = smul.addr %s924, 32
          %s926 = scalar_lea.hbm %s10, %s925
          %s928 = sshll.u32 %s886, 4
          %s929 = int_to_ptr.vmem [resolvable:$true] %s928
          %931 = dma.vmem_to_hbm [thread:$0]  %s929, 64, %s926, %s883
        $region68: #{tpu_custom_call.1} parent=51 // pred_fallthru
          _
        // Predicated region
        $region69: #{tpu_custom_call.1} parent=51 // pred_check
          %p932 = pneg %p309
        $region70: #{tpu_custom_call.1} parent=51 // pred_check_branch
          %934 = sbr.rel (%p932) target = $region72
        $region71: #{tpu_custom_call.1} parent=51 // pred_region
          _
        $region72: #{tpu_custom_call.1} parent=51 // pred_fallthru
          _
      $region52: #{tpu_custom_call.1} parent=5 // pred_fallthru
        _
      %p935 = scmp.le.s32.totalorder 2, %s25
      // Predicated region
      $region73: #{tpu_custom_call.1} parent=5 // pred_check
        %p936 = pneg %p935
      $region74: #{tpu_custom_call.1} parent=5 // pred_check_branch
        %938 = sbr.rel (%p936) target = $region76
      $region75: #{tpu_custom_call.1} parent=5 // pred_region
        %s939 = ssub.s32 %s25, 2
        // Predicated region
        $region77: #{tpu_custom_call.1} parent=75 // pred_check
          %p940 = pneg %p237
        $region78: #{tpu_custom_call.1} parent=75 // pred_check_branch
          %942 = sbr.rel (%p940) target = $region80
        $region79: #{tpu_custom_call.1} parent=75 // pred_region
          %s943 = sand.u32 %s222, 1
          %s944 = scalar_lea.sflag [#allocation3], %s943
          %s945 = sand.u32 %s222, 1
          %s946 = smul.addr %s945, 2
          %s947 = scalar_lea.vmem [#allocation5], %s946
          %948 = dma.done %s944, 32
        $region80: #{tpu_custom_call.1} parent=75 // pred_fallthru
          _
        // Predicated region
        $region81: #{tpu_custom_call.1} parent=75 // pred_check
          %p949 = pneg %p263
        $region82: #{tpu_custom_call.1} parent=75 // pred_check_branch
          %951 = sbr.rel (%p949) target = $region84
        $region83: #{tpu_custom_call.1} parent=75 // pred_region
          %s952 = sand.u32 %s31, 1
          %s953 = scalar_lea.sflag [#allocation7], %s952
          %s954 = sand.u32 %s248, 1
          %s955 = smul.addr %s954, 4
          %s956 = scalar_lea.vmem [#allocation6], %s955
          %957 = dma.done %s953, 64
        $region84: #{tpu_custom_call.1} parent=75 // pred_fallthru
          _
        // Predicated region
        $region85: #{tpu_custom_call.1} parent=75 // pred_check
          %p958 = pneg %p289
        $region86: #{tpu_custom_call.1} parent=75 // pred_check_branch
          %960 = sbr.rel (%p958) target = $region88
        $region87: #{tpu_custom_call.1} parent=75 // pred_region
          %s961 = sand.u32 %s31, 1
          %s962 = scalar_lea.sflag [#allocation7], %s961
          %s963 = sand.u32 %s274, 1
          %s964 = smul.addr %s963, 4
          %s965 = scalar_lea.vmem [#allocation8], %s964
          %966 = dma.done %s962, 64
        $region88: #{tpu_custom_call.1} parent=75 // pred_fallthru
          _
        // Predicated region
        $region89: #{tpu_custom_call.1} parent=75 // pred_check
          %p967 = pneg %p315
        $region90: #{tpu_custom_call.1} parent=75 // pred_check_branch
          %969 = sbr.rel (%p967) target = $region92
        $region91: #{tpu_custom_call.1} parent=75 // pred_region
          %p970 = scmp.lt.s32.totalorder %s31, 1
          %s971 = scalar_select %p970, %s31, 1
          %s972 = scalar_lea.vmem %s11, %s971
        $region92: #{tpu_custom_call.1} parent=75 // pred_fallthru
          _
      $region76: #{tpu_custom_call.1} parent=5 // pred_fallthru
        _
    $region6: #{tpu_custom_call.1} parent=1 // loop_footer
      %s29 = sadd.s32 1, %s25
    $region7: #{tpu_custom_call.1} parent=1 // loop_footer_branch
      %24 = sbr.rel target = $region3
    $region8: #{tpu_custom_call.1} parent=1 // loop_exit
      _
    %973 = vsyncpa [#allocation3], 1
    %s974 = scalar_lea.sflag [#allocation3], 1
    %975 = vsyncpa %s974, 1
    %976 = vsyncpa [#allocation7], 1
    %s977 = scalar_lea.sflag [#allocation7], 1
    %978 = vsyncpa %s977, 1
    %979 = vsyncpa [#allocation4], 1
    %s980 = scalar_lea.sflag [#allocation4], 1
    %981 = vsyncpa %s980, 1

</llo_original>
